<compile_context>
chip_gen: v6e
topology: v6e:2x2x1
jax: 0.10.0
libtpu: 0.0.40
codegen_flags: <defaults>
</compile_context>

<pallas_src>
import functools

import jax
import jax.numpy as jnp
from jax.experimental import pallas as pl
from jax.experimental.pallas import tpu as pltpu

LANES = 128          # TPU lane width; every weight is padded to 128 out-lanes
N_LAYERS = 5
BIAS_ROWS = 8        # biases packed into one sublane-aligned 8-row block
SLAB_ROWS = N_LAYERS * LANES + BIAS_ROWS


def _round_up(x, m):
    return (x + m - 1) // m * m


def mlp_softmax_kernel(x_ref, p_ref, o_ref, *, out_dim, in_pad, compute_dtype):
    """Fused 5-layer MLP + ReLU + masked softmax over one batch tile."""
    x = x_ref[...]                                                    # (TB, in_pad) f32
    biases = p_ref[N_LAYERS * LANES:N_LAYERS * LANES + BIAS_ROWS, :]  # (8, 128) f32

    def dense(h, layer, k_rows):
        # Static slice of the resident parameter slab; MXU operands in
        # compute_dtype, accumulation + bias add in f32.
        w = p_ref[layer * LANES:layer * LANES + k_rows, :].astype(compute_dtype)
        y = jnp.dot(h.astype(compute_dtype), w,
                    preferred_element_type=jnp.float32)
        return y + biases[layer:layer + 1, :]                         # f32 VPU add

    h = dense(x, 0, in_pad)                                           # linear1
    h = jnp.maximum(dense(h, 1, LANES), 0.0)                          # linear2 + relu
    h = dense(h, 2, LANES)                                            # linear3
    h = jnp.maximum(dense(h, 3, LANES), 0.0)                          # linear4 + relu
    logits = dense(h, 4, LANES)                                       # linear5

    # Numerically stable softmax over the first `out_dim` lanes only; padded
    # lanes (which hold exact zeros) are masked to a large negative value.
    lane = jax.lax.broadcasted_iota(jnp.int32, logits.shape, 1)
    logits = jnp.where(lane < out_dim, logits, -1e30)
    m = jnp.max(logits, axis=-1, keepdims=True)
    e = jnp.exp(logits - m)
    denom = jnp.sum(e, axis=-1, keepdims=True)
    # Exact divide (bug fix): approx reciprocal broke the sum-to-1 property.
    o_ref[...] = (e / denom).astype(o_ref.dtype)


def pack_params(params):
    """Pack 5 (W, b) pairs into one zero-padded (SLAB_ROWS, 128) f32 slab."""
    slab = jnp.zeros((SLAB_ROWS, LANES), jnp.float32)
    for i in range(N_LAYERS):
        w = params[f"w{i + 1}"]            # (in, out), already transposed vs torch
        b = params[f"b{i + 1}"]            # (1, out)
        assert w.shape[0] <= LANES and w.shape[1] <= LANES
        slab = slab.at[i * LANES:i * LANES + w.shape[0], :w.shape[1]].set(w)
        slab = slab.at[N_LAYERS * LANES + i, :b.shape[1]].set(b[0])
    return slab


def mlp_forward(x, slab, out_dim, *, compute_dtype=jnp.float32, tb=None):
    """x: (B, in_dim) f32, slab: packed params. Returns (B, out_dim) softmax."""
    B, in_dim = x.shape
    in_pad = _round_up(in_dim, 8)
    if tb is None:
        tb = min(512, _round_up(B, 8))     # >=512-row batch tiles once B is big
    b_pad = _round_up(B, tb)
    if b_pad != B or in_pad != in_dim:
        x = jnp.pad(x, ((0, b_pad - B), (0, in_pad - in_dim)))

    kernel = functools.partial(mlp_softmax_kernel, out_dim=out_dim,
                               in_pad=in_pad, compute_dtype=compute_dtype)
    out = pl.pallas_call(
        kernel,
        out_shape=jax.ShapeDtypeStruct((b_pad, LANES), jnp.float32),
        grid=(b_pad // tb,),
        in_specs=[
            pl.BlockSpec((tb, in_pad), lambda i: (i, 0)),        # batch-blocked x
            pl.BlockSpec((SLAB_ROWS, LANES), lambda i: (0, 0)),  # resident params
        ],
        out_specs=pl.BlockSpec((tb, LANES), lambda i: (i, 0)),   # lane-dense out
        compiler_params=pltpu.CompilerParams(
            dimension_semantics=("parallel",)),                  # 2 TCs on v7x
    )(x, slab)
    return out[:B, :out_dim]


def init_params(key, input_dim, output_dim):
    """Deterministic init mimicking nn.Linear's uniform(-1/sqrt(fan_in), +)."""
    dims = [input_dim, 64, 32, 16, 8, output_dim]
    params = {}
    for i in range(5):
        fan_in, fan_out = dims[i], dims[i + 1]
        key, kw, kb = jax.random.split(key, 3)
        bound = 1.0 / jnp.sqrt(jnp.float32(fan_in))
        # stored as (in, out) — transposed relative to PyTorch's (out, in)
        params[f"w{i + 1}"] = jax.random.uniform(
            kw, (fan_in, fan_out), jnp.float32, -bound, bound)
        params[f"b{i + 1}"] = jax.random.uniform(
            kb, (1, fan_out), jnp.float32, -bound, bound)
    return params


def reference_forward(x, params):
    """Plain-JAX reference matching the PyTorch forward."""
    h = x @ params["w1"] + params["b1"]
    h = h @ params["w2"] + params["b2"]
    h = jnp.maximum(h, 0.0)
    h = h @ params["w3"] + params["b3"]
    h = h @ params["w4"] + params["b4"]
    h = jnp.maximum(h, 0.0)
    logits = h @ params["w5"] + params["b5"]
    return jax.nn.softmax(logits, axis=-1)


if __name__ == "__main__":
    # dacon "dechul" (loan grade) task: 13 input features, 7 output classes.
    INPUT_DIM, OUTPUT_DIM, BATCH = 13, 7, 8

    key = jax.random.PRNGKey(0)
    kx, kp = jax.random.split(key)
    x = jax.random.normal(kx, (BATCH, INPUT_DIM), jnp.float32)
    params = init_params(kp, INPUT_DIM, OUTPUT_DIM)
    slab = pack_params(params)

    ref = reference_forward(x, params)

    # f32 MXU path: layer math and softmax are exact -> tight tolerance.
    out = jax.block_until_ready(mlp_forward(x, slab, OUTPUT_DIM))
    assert out.shape == (BATCH, OUTPUT_DIM)
    assert jnp.allclose(out, ref, atol=1e-5, rtol=1e-5), "f32 path mismatch vs reference"
    assert jnp.allclose(jnp.sum(out, axis=-1), 1.0, atol=1e-4), "softmax rows must sum to 1"

    # bf16 MXU-operand path (native on v6e/v7x; MXU-only bf16 on v5e), f32
    # accumulation and f32 elementwise math.
    out_bf16 = jax.block_until_ready(
        mlp_forward(x, slab, OUTPUT_DIM, compute_dtype=jnp.bfloat16))
    assert out_bf16.shape == (BATCH, OUTPUT_DIM)
    assert jnp.allclose(jnp.sum(out_bf16, axis=-1), 1.0, atol=1e-4), \
        "bf16-path softmax rows must sum to 1"
    assert jnp.allclose(out_bf16, ref, atol=6e-2, rtol=6e-2), "bf16 path mismatch vs reference"

    print("KERNEL_OK")
</pallas_src>

<mosaic_0001>
module attributes {stable_mosaic.version = 11 : i64} {
  func.func @mlp_softmax_kernel(%arg0: i32, %arg1: memref<8x16xf32, #tpu.memory_space<vmem>>, %arg2: memref<648x128xf32, #tpu.memory_space<vmem>>, %arg3: memref<8x128xf32, #tpu.memory_space<vmem>>) attributes {dimension_semantics = [#tpu.dimension_semantics<parallel>], iteration_bounds = array<i64: 1>, scalar_prefetch = 0 : i64, scratch_operands = 0 : i64, tpu.core_type = #tpu.core_type<tc>, window_params = [{transform_indices = @transform_0, window_bounds = array<i64: 8, 16>}, {pipeline_mode = #tpu.pipeline_mode<synchronous>, transform_indices = @transform_1, window_bounds = array<i64: 648, 128>}, {transform_indices = @transform_2, window_bounds = array<i64: 8, 128>}]} {
    %c0 = arith.constant 0 : index
    %c0_0 = arith.constant 0 : index
    %0 = vector.load %arg1[%c0, %c0_0] : memref<8x16xf32, #tpu.memory_space<vmem>>, vector<8x16xf32>
    %c640 = arith.constant 640 : index
    %c0_1 = arith.constant 0 : index
    %1 = vector.load %arg2[%c640, %c0_1] : memref<648x128xf32, #tpu.memory_space<vmem>>, vector<8x128xf32>
    %c0_2 = arith.constant 0 : index
    %c0_3 = arith.constant 0 : index
    %2 = vector.load %arg2[%c0_2, %c0_3] : memref<648x128xf32, #tpu.memory_space<vmem>>, vector<16x128xf32>
    %cst = arith.constant dense<0.000000e+00> : vector<8x128xf32>
    %3 = tpu.matmul %0, %2, %cst {dimension_numbers = #tpu.dot_dimension_numbers<[1], [0], [0], [1], [0, 0, 1, 1], [], []>} : vector<8x16xf32>, vector<16x128xf32>, vector<8x128xf32> -> vector<8x128xf32>
    %4 = vector.extract_strided_slice %1 {offsets = [0, 0], sizes = [1, 128], strides = [1, 1]} : vector<8x128xf32> to vector<1x128xf32>
    %5 = vector.broadcast %4 : vector<1x128xf32> to vector<8x128xf32>
    %6 = arith.addf %3, %5 : vector<8x128xf32>
    %c128 = arith.constant 128 : index
    %c0_4 = arith.constant 0 : index
    %7 = vector.load %arg2[%c128, %c0_4] : memref<648x128xf32, #tpu.memory_space<vmem>>, vector<128x128xf32>
    %cst_5 = arith.constant dense<0.000000e+00> : vector<8x128xf32>
    %8 = tpu.matmul %6, %7, %cst_5 {dimension_numbers = #tpu.dot_dimension_numbers<[1], [0], [0], [1], [0, 0, 1, 1], [], []>} : vector<8x128xf32>, vector<128x128xf32>, vector<8x128xf32> -> vector<8x128xf32>
    %9 = vector.extract_strided_slice %1 {offsets = [1, 0], sizes = [1, 128], strides = [1, 1]} : vector<8x128xf32> to vector<1x128xf32>
    %10 = vector.broadcast %9 : vector<1x128xf32> to vector<8x128xf32>
    %11 = arith.addf %8, %10 : vector<8x128xf32>
    %cst_6 = arith.constant 0.000000e+00 : f32
    %12 = vector.broadcast %cst_6 : f32 to vector<8x128xf32>
    %13 = arith.maximumf %11, %12 : vector<8x128xf32>
    %c256 = arith.constant 256 : index
    %c0_7 = arith.constant 0 : index
    %14 = vector.load %arg2[%c256, %c0_7] : memref<648x128xf32, #tpu.memory_space<vmem>>, vector<128x128xf32>
    %cst_8 = arith.constant dense<0.000000e+00> : vector<8x128xf32>
    %15 = tpu.matmul %13, %14, %cst_8 {dimension_numbers = #tpu.dot_dimension_numbers<[1], [0], [0], [1], [0, 0, 1, 1], [], []>} : vector<8x128xf32>, vector<128x128xf32>, vector<8x128xf32> -> vector<8x128xf32>
    %16 = vector.extract_strided_slice %1 {offsets = [2, 0], sizes = [1, 128], strides = [1, 1]} : vector<8x128xf32> to vector<1x128xf32>
    %17 = vector.broadcast %16 : vector<1x128xf32> to vector<8x128xf32>
    %18 = arith.addf %15, %17 : vector<8x128xf32>
    %c384 = arith.constant 384 : index
    %c0_9 = arith.constant 0 : index
    %19 = vector.load %arg2[%c384, %c0_9] : memref<648x128xf32, #tpu.memory_space<vmem>>, vector<128x128xf32>
    %cst_10 = arith.constant dense<0.000000e+00> : vector<8x128xf32>
    %20 = tpu.matmul %18, %19, %cst_10 {dimension_numbers = #tpu.dot_dimension_numbers<[1], [0], [0], [1], [0, 0, 1, 1], [], []>} : vector<8x128xf32>, vector<128x128xf32>, vector<8x128xf32> -> vector<8x128xf32>
    %21 = vector.extract_strided_slice %1 {offsets = [3, 0], sizes = [1, 128], strides = [1, 1]} : vector<8x128xf32> to vector<1x128xf32>
    %22 = vector.broadcast %21 : vector<1x128xf32> to vector<8x128xf32>
    %23 = arith.addf %20, %22 : vector<8x128xf32>
    %cst_11 = arith.constant 0.000000e+00 : f32
    %24 = vector.broadcast %cst_11 : f32 to vector<8x128xf32>
    %25 = arith.maximumf %23, %24 : vector<8x128xf32>
    %c512 = arith.constant 512 : index
    %c0_12 = arith.constant 0 : index
    %26 = vector.load %arg2[%c512, %c0_12] : memref<648x128xf32, #tpu.memory_space<vmem>>, vector<128x128xf32>
    %cst_13 = arith.constant dense<0.000000e+00> : vector<8x128xf32>
    %27 = tpu.matmul %25, %26, %cst_13 {dimension_numbers = #tpu.dot_dimension_numbers<[1], [0], [0], [1], [0, 0, 1, 1], [], []>} : vector<8x128xf32>, vector<128x128xf32>, vector<8x128xf32> -> vector<8x128xf32>
    %28 = vector.extract_strided_slice %1 {offsets = [4, 0], sizes = [1, 128], strides = [1, 1]} : vector<8x128xf32> to vector<1x128xf32>
    %29 = vector.broadcast %28 : vector<1x128xf32> to vector<8x128xf32>
    %30 = arith.addf %27, %29 : vector<8x128xf32>
    %31 = tpu.iota {dimensions = array<i32: 1>} : vector<8x128xi32>
    %c7_i32 = arith.constant 7 : i32
    %32 = vector.broadcast %c7_i32 : i32 to vector<8x128xi32>
    %33 = arith.cmpi slt, %31, %32 : vector<8x128xi32>
    %cst_14 = arith.constant -1.000000e+30 : f32
    %34 = vector.broadcast %cst_14 : f32 to vector<8x128xf32>
    %35 = arith.select %33, %30, %34 : vector<8x128xi1>, vector<8x128xf32>
    %cst_15 = arith.constant dense<0xFF800000> : vector<8xf32>
    %36 = vector.multi_reduction <maximumf>, %35, %cst_15 [1] : vector<8x128xf32> to vector<8xf32>
    %37 = vector.shape_cast %36 : vector<8xf32> to vector<8x1xf32>
    %38 = vector.broadcast %37 : vector<8x1xf32> to vector<8x128xf32>
    %39 = arith.subf %35, %38 : vector<8x128xf32>
    %40 = math.exp %39 : vector<8x128xf32>
    %cst_16 = arith.constant dense<0.000000e+00> : vector<8xf32>
    %41 = vector.multi_reduction <add>, %40, %cst_16 [1] : vector<8x128xf32> to vector<8xf32>
    %42 = vector.shape_cast %41 : vector<8xf32> to vector<8x1xf32>
    %43 = vector.broadcast %42 : vector<8x1xf32> to vector<8x128xf32>
    %44 = arith.divf %40, %43 : vector<8x128xf32>
    %c0_17 = arith.constant 0 : index
    %c0_18 = arith.constant 0 : index
    %45 = vector.load %arg3[%c0_17, %c0_18] : memref<8x128xf32, #tpu.memory_space<vmem>>, vector<8x128xf32>
    tpu.vector_store %arg3[%c0_17, %c0_18], %44 {strides = array<i32>} : memref<8x128xf32, #tpu.memory_space<vmem>>, vector<8x128xf32>,
    return
  }
  func.func @transform_0(%arg0: i32) -> (i32, i32) {
    %c0_i32 = arith.constant 0 : i32
    %c0_i32_0 = arith.constant 0 : i32
    return %arg0, %c0_i32 : i32, i32
  }
  func.func @transform_1(%arg0: i32) -> (i32, i32) {
    %c0_i32 = arith.constant 0 : i32
    %c0_i32_0 = arith.constant 0 : i32
    %c0_i32_1 = arith.constant 0 : i32
    return %c0_i32, %c0_i32_0 : i32, i32
  }
  func.func @transform_2(%arg0: i32) -> (i32, i32) {
    %c0_i32 = arith.constant 0 : i32
    %c0_i32_0 = arith.constant 0 : i32
    return %arg0, %c0_i32 : i32, i32
  }
}

</mosaic_0001>

<llo_original>
// kernel: tpu_custom_call.1
$region0: #{tpu_custom_call.1}
  #allocation0 [shape = 'u32[]', space=smem, size = 0x4, offset = 0x4, fixed_abs, tag = 'smem constant byte address 0x4 - core index']
  #allocation1 [shape = 'u32[144,128]{1,0:T(1,128)}', space=vmem, size = 0x12000, scoped, tag = 'internal scratch']
  %s0 = inlined_call_operand.hbm [shape: f32[8,16], index: 0, kind: input, shape index: {}]
  %s1 = inlined_call_operand.hbm [shape: f32[648,128], index: 1, kind: input, shape index: {}]
  %s2 = inlined_call_operand.hbm [shape: f32[8,128], index: 2, kind: output, shape index: {}]
  %s3 = sld [smem:[#allocation0]]
  $region26: #{tpu_custom_call.1} parent=0
    _
  %s5 = ssub.s32 1, %s3
  %s6 = scalar_select 0, %s5, %s3
  $region1: #{tpu_custom_call.1} parent=0
    #allocation2 [shape = 'u8[4096]{0}', space=vmem, size = 0x1000, scoped, tag = 'input window, operand 0, single buffered']
    #allocation3 [shape = 's32[1]{0}', space=sflag, size = 0x4, scoped, tag = 'scoped memory for tpu_custom_call.1']
    #allocation4 [shape = 's32[1]{0}', space=sflag, size = 0x4, scoped, tag = 'scoped memory for tpu_custom_call.1']
    #allocation5 [shape = 'u8[331776]{0}', space=vmem, size = 0x51000, scoped, tag = 'input window, operand 1, single buffered']
    #allocation6 [shape = 's32[1]{0}', space=sflag, size = 0x4, scoped, tag = 'scoped memory for tpu_custom_call.1']
    #allocation7 [shape = 'u8[4096]{0}', space=vmem, size = 0x1000, scoped, tag = 'output window, operand 0, single buffered']
    %7 = vsyncpa [#allocation3], 0
    %8 = vsyncpa [#allocation6], 0
    %9 = vsyncpa [#allocation4], 0
    // Predicated region
    $region2: #{tpu_custom_call.1} parent=1 // pred_check
      _
    $region3: #{tpu_custom_call.1} parent=1 // pred_check_branch
      %11 = sbr.rel (0) target = $region5
    $region4: #{tpu_custom_call.1} parent=1 // pred_region
      %s13 = ssub.s32 128, 128
      %14 = vsyncadd [#allocation3], %s13
      %s16 = sshll.u32 [#allocation2], 4
      %s17 = int_to_ptr.vmem [resolvable:$true] %s16
      %19 = dma.hbm_to_vmem [thread:$0]  %s0, 128, %s17, [#allocation3]
    $region5: #{tpu_custom_call.1} parent=1 // pred_fallthru
      _
    // Predicated region
    $region6: #{tpu_custom_call.1} parent=1 // pred_check
      _
    $region7: #{tpu_custom_call.1} parent=1 // pred_check_branch
      %21 = sbr.rel (0) target = $region9
    $region8: #{tpu_custom_call.1} parent=1 // pred_region
      %s23 = ssub.s32 10368, 10368
      %24 = vsyncadd [#allocation6], %s23
      %s25 = sshll.u32 [#allocation5], 4
      %s26 = int_to_ptr.vmem [resolvable:$true] %s25
      %31 = dma.hbm_to_vmem [thread:$0]  %s1, 10368, %s26, [#allocation6], 128, 128, 8
    $region9: #{tpu_custom_call.1} parent=1 // pred_fallthru
      _
    // Predicated region
    $region10: #{tpu_custom_call.1} parent=1 // pred_check
      _
    $region11: #{tpu_custom_call.1} parent=1 // pred_check_branch
      %33 = sbr.rel (0) target = $region13
    $region12: #{tpu_custom_call.1} parent=1 // pred_region
      %34 = dma.done [#allocation3], 128
    $region13: #{tpu_custom_call.1} parent=1 // pred_fallthru
      _
    // Predicated region
    $region14: #{tpu_custom_call.1} parent=1 // pred_check
      _
    $region15: #{tpu_custom_call.1} parent=1 // pred_check_branch
      %36 = sbr.rel (0) target = $region17
    $region16: #{tpu_custom_call.1} parent=1 // pred_region
      %37 = dma.done [#allocation6], 10368
    $region17: #{tpu_custom_call.1} parent=1 // pred_fallthru
      _
    %v38 = vld [vmem:[#allocation2] sm:$0xff]
    %v39 = vld [vmem:[#allocation5 + $0x280] sm:$0xff]
    %v40 = vld [vmem:[#allocation5] sm:$0xff]
    %v41 = vld [vmem:[#allocation5 + $0x8] sm:$0xff]
    %v42 = vlaneseq
    %v43 = vshrl.u32 %v42, 7
    %v44 = vsub.s32 0, %v43
    %v45 = vrot.slane %v39, %v44
    %vm46 = vcmask 130048
    %v48 = vsel %vm46, %v38, 0
    %50 = vmatprep.subr.mxu0 0.0
    %51 = vmatpush1.msra.mxu0 0.0
    %52 = vmatprep.subr.mxu0 0.0
    %53 = vmatpush1.msra.mxu0 0.0
    %54 = vmatprep.subr.mxu0 0.0
    %55 = vmatpush1.msra.mxu0 0.0
    %56 = vmatprep.subr.mxu0 0.0
    %57 = vmatpush1.msra.mxu0 0.0
    %58 = vmatprep.subr.mxu0 0.0
    %59 = vmatpush1.msra.mxu0 0.0
    %60 = vmatprep.subr.mxu0 0.0
    %61 = vmatpush1.msra.mxu0 0.0
    %62 = vmatprep.subr.mxu0 0.0
    %63 = vmatpush1.msra.mxu0 0.0
    %64 = vmatprep.subr.mxu0 0.0
    %65 = vmatpush1.msra.mxu0 0.0
    %66 = vmatprep.subr.mxu0 0.0
    %67 = vmatpush1.msra.mxu0 0.0
    %68 = vmatprep.subr.mxu0 0.0
    %69 = vmatpush1.msra.mxu0 0.0
    %70 = vmatprep.subr.mxu0 0.0
    %71 = vmatpush1.msra.mxu0 0.0
    %72 = vmatprep.subr.mxu0 0.0
    %73 = vmatpush1.msra.mxu0 0.0
    %74 = vmatprep.subr.mxu0 0.0
    %75 = vmatpush1.msra.mxu0 0.0
    %76 = vmatprep.subr.mxu0 0.0
    %77 = vmatpush1.msra.mxu0 0.0
    %78 = vmatprep.subr.mxu0 0.0
    %79 = vmatpush1.msra.mxu0 %v41
    %80 = vmatprep.subr.mxu0 0.0
    %81 = vmatpush1.msra.mxu0 %v40
    %82 = vmatprep.subr.mxu0 0.0
    %83 = vmatpush2.msra.mxu0 0.0
    %84 = vmatprep.subr.mxu0 0.0
    %85 = vmatpush2.msra.mxu0 0.0
    %86 = vmatprep.subr.mxu0 0.0
    %87 = vmatpush2.msra.mxu0 0.0
    %88 = vmatprep.subr.mxu0 0.0
    %89 = vmatpush2.msra.mxu0 0.0
    %90 = vmatprep.subr.mxu0 0.0
    %91 = vmatpush2.msra.mxu0 0.0
    %92 = vmatprep.subr.mxu0 0.0
    %93 = vmatpush2.msra.mxu0 0.0
    %94 = vmatprep.subr.mxu0 0.0
    %95 = vmatpush2.msra.mxu0 0.0
    %96 = vmatprep.subr.mxu0 0.0
    %97 = vmatpush2.msra.mxu0 0.0
    %98 = vmatprep.subr.mxu0 0.0
    %99 = vmatpush2.msra.mxu0 0.0
    %100 = vmatprep.subr.mxu0 0.0
    %101 = vmatpush2.msra.mxu0 0.0
    %102 = vmatprep.subr.mxu0 0.0
    %103 = vmatpush2.msra.mxu0 0.0
    %104 = vmatprep.subr.mxu0 0.0
    %105 = vmatpush2.msra.mxu0 0.0
    %106 = vmatprep.subr.mxu0 0.0
    %107 = vmatpush2.msra.mxu0 0.0
    %108 = vmatprep.subr.mxu0 0.0
    %109 = vmatpush2.msra.mxu0 0.0
    %110 = vmatprep.subr.mxu0 0.0
    %111 = vmatpush2.msra.mxu0 0.0
    %112 = vmatprep.subr.mxu0 0.0
    %113 = vmatpush2.msra.mxu0 0.0
    %114 = vmatprep.mubr.f32.mxu0 0.0
    %115 = vmatmul.mubr.f32.gmra.mxu0 %v48
    %v116 = vpop.f32.mrf.mxu0
    %v117 = vadd.f32 %v45, %v116
    %v118 = vpop.f32.mrf.mxu0
    %119 = vdwg.mxu0
    %v120 = vld [vmem:[#allocation5 + $0x80] sm:$0xff]
    %v121 = vld [vmem:[#allocation5 + $0x88] sm:$0xff]
    %v122 = vld [vmem:[#allocation5 + $0x90] sm:$0xff]
    %v123 = vld [vmem:[#allocation5 + $0x98] sm:$0xff]
    %v124 = vld [vmem:[#allocation5 + $0xa0] sm:$0xff]
    %v125 = vld [vmem:[#allocation5 + $0xa8] sm:$0xff]
    %v126 = vld [vmem:[#allocation5 + $0xb0] sm:$0xff]
    %v127 = vld [vmem:[#allocation5 + $0xb8] sm:$0xff]
    %v128 = vld [vmem:[#allocation5 + $0xc0] sm:$0xff]
    %v129 = vld [vmem:[#allocation5 + $0xc8] sm:$0xff]
    %v130 = vld [vmem:[#allocation5 + $0xd0] sm:$0xff]
    %v131 = vld [vmem:[#allocation5 + $0xd8] sm:$0xff]
    %v132 = vld [vmem:[#allocation5 + $0xe0] sm:$0xff]
    %v133 = vld [vmem:[#allocation5 + $0xe8] sm:$0xff]
    %v134 = vld [vmem:[#allocation5 + $0xf0] sm:$0xff]
    %v135 = vld [vmem:[#allocation5 + $0xf8] sm:$0xff]
    %v136 = vlaneseq
    %v137 = vshrl.u32 %v136, 7
    %v138 = vsub.s32 1, %v137
    %v139 = vrot.slane %v39, %v138
    %140 = vmatprep.subr.mxu0 0.0
    %141 = vmatpush1.msra.mxu0 %v135
    %142 = vmatprep.subr.mxu0 0.0
    %143 = vmatpush1.msra.mxu0 %v134
    %144 = vmatprep.subr.mxu0 0.0
    %145 = vmatpush1.msra.mxu0 %v133
    %146 = vmatprep.subr.mxu0 0.0
    %147 = vmatpush1.msra.mxu0 %v132
    %148 = vmatprep.subr.mxu0 0.0
    %149 = vmatpush1.msra.mxu0 %v131
    %150 = vmatprep.subr.mxu0 0.0
    %151 = vmatpush1.msra.mxu0 %v130
    %152 = vmatprep.subr.mxu0 0.0
    %153 = vmatpush1.msra.mxu0 %v129
    %154 = vmatprep.subr.mxu0 0.0
    %155 = vmatpush1.msra.mxu0 %v128
    %156 = vmatprep.subr.mxu0 0.0
    %157 = vmatpush1.msra.mxu0 %v127
    %158 = vmatprep.subr.mxu0 0.0
    %159 = vmatpush1.msra.mxu0 %v126
    %160 = vmatprep.subr.mxu0 0.0
    %161 = vmatpush1.msra.mxu0 %v125
    %162 = vmatprep.subr.mxu0 0.0
    %163 = vmatpush1.msra.mxu0 %v124
    %164 = vmatprep.subr.mxu0 0.0
    %165 = vmatpush1.msra.mxu0 %v123
    %166 = vmatprep.subr.mxu0 0.0
    %167 = vmatpush1.msra.mxu0 %v122
    %168 = vmatprep.subr.mxu0 0.0
    %169 = vmatpush1.msra.mxu0 %v121
    %170 = vmatprep.subr.mxu0 0.0
    %171 = vmatpush1.msra.mxu0 %v120
    %172 = vmatprep.subr.mxu0 0.0
    %173 = vmatpush2.msra.mxu0 0.0
    %174 = vmatprep.subr.mxu0 0.0
    %175 = vmatpush2.msra.mxu0 0.0
    %176 = vmatprep.subr.mxu0 0.0
    %177 = vmatpush2.msra.mxu0 0.0
    %178 = vmatprep.subr.mxu0 0.0
    %179 = vmatpush2.msra.mxu0 0.0
    %180 = vmatprep.subr.mxu0 0.0
    %181 = vmatpush2.msra.mxu0 0.0
    %182 = vmatprep.subr.mxu0 0.0
    %183 = vmatpush2.msra.mxu0 0.0
    %184 = vmatprep.subr.mxu0 0.0
    %185 = vmatpush2.msra.mxu0 0.0
    %186 = vmatprep.subr.mxu0 0.0
    %187 = vmatpush2.msra.mxu0 0.0
    %188 = vmatprep.subr.mxu0 0.0
    %189 = vmatpush2.msra.mxu0 0.0
    %190 = vmatprep.subr.mxu0 0.0
    %191 = vmatpush2.msra.mxu0 0.0
    %192 = vmatprep.subr.mxu0 0.0
    %193 = vmatpush2.msra.mxu0 0.0
    %194 = vmatprep.subr.mxu0 0.0
    %195 = vmatpush2.msra.mxu0 0.0
    %196 = vmatprep.subr.mxu0 0.0
    %197 = vmatpush2.msra.mxu0 0.0
    %198 = vmatprep.subr.mxu0 0.0
    %199 = vmatpush2.msra.mxu0 0.0
    %200 = vmatprep.subr.mxu0 0.0
    %201 = vmatpush2.msra.mxu0 0.0
    %202 = vmatprep.subr.mxu0 0.0
    %203 = vmatpush2.msra.mxu0 0.0
    %204 = vmatprep.mubr.f32.mxu0 0.0
    %205 = vmatmul.mubr.f32.gmra.mxu0 %v117
    %v206 = vpop.f32.mrf.mxu0
    %v207 = vadd.f32 %v139, %v206
    %v208 = vpop.f32.mrf.mxu0
    %209 = vdwg.mxu0
    %v210 = vmax.f32 %v207, 0.0
    %v211 = vld [vmem:[#allocation5 + $0x100] sm:$0xff]
    %v212 = vld [vmem:[#allocation5 + $0x108] sm:$0xff]
    %v213 = vld [vmem:[#allocation5 + $0x110] sm:$0xff]
    %v214 = vld [vmem:[#allocation5 + $0x118] sm:$0xff]
    %v215 = vld [vmem:[#allocation5 + $0x120] sm:$0xff]
    %v216 = vld [vmem:[#allocation5 + $0x128] sm:$0xff]
    %v217 = vld [vmem:[#allocation5 + $0x130] sm:$0xff]
    %v218 = vld [vmem:[#allocation5 + $0x138] sm:$0xff]
    %v219 = vld [vmem:[#allocation5 + $0x140] sm:$0xff]
    %v220 = vld [vmem:[#allocation5 + $0x148] sm:$0xff]
    %v221 = vld [vmem:[#allocation5 + $0x150] sm:$0xff]
    %v222 = vld [vmem:[#allocation5 + $0x158] sm:$0xff]
    %v223 = vld [vmem:[#allocation5 + $0x160] sm:$0xff]
    %v224 = vld [vmem:[#allocation5 + $0x168] sm:$0xff]
    %v225 = vld [vmem:[#allocation5 + $0x170] sm:$0xff]
    %v226 = vld [vmem:[#allocation5 + $0x178] sm:$0xff]
    %v227 = vlaneseq
    %v228 = vshrl.u32 %v227, 7
    %v229 = vsub.s32 2, %v228
    %v230 = vrot.slane %v39, %v229
    %231 = vmatprep.subr.mxu0 0.0
    %232 = vmatpush1.msra.mxu0 %v226
    %233 = vmatprep.subr.mxu0 0.0
    %234 = vmatpush1.msra.mxu0 %v225
    %235 = vmatprep.subr.mxu0 0.0
    %236 = vmatpush1.msra.mxu0 %v224
    %237 = vmatprep.subr.mxu0 0.0
    %238 = vmatpush1.msra.mxu0 %v223
    %239 = vmatprep.subr.mxu0 0.0
    %240 = vmatpush1.msra.mxu0 %v222
    %241 = vmatprep.subr.mxu0 0.0
    %242 = vmatpush1.msra.mxu0 %v221
    %243 = vmatprep.subr.mxu0 0.0
    %244 = vmatpush1.msra.mxu0 %v220
    %245 = vmatprep.subr.mxu0 0.0
    %246 = vmatpush1.msra.mxu0 %v219
    %247 = vmatprep.subr.mxu0 0.0
    %248 = vmatpush1.msra.mxu0 %v218
    %249 = vmatprep.subr.mxu0 0.0
    %250 = vmatpush1.msra.mxu0 %v217
    %251 = vmatprep.subr.mxu0 0.0
    %252 = vmatpush1.msra.mxu0 %v216
    %253 = vmatprep.subr.mxu0 0.0
    %254 = vmatpush1.msra.mxu0 %v215
    %255 = vmatprep.subr.mxu0 0.0
    %256 = vmatpush1.msra.mxu0 %v214
    %257 = vmatprep.subr.mxu0 0.0
    %258 = vmatpush1.msra.mxu0 %v213
    %259 = vmatprep.subr.mxu0 0.0
    %260 = vmatpush1.msra.mxu0 %v212
    %261 = vmatprep.subr.mxu0 0.0
    %262 = vmatpush1.msra.mxu0 %v211
    %263 = vmatprep.subr.mxu0 0.0
    %264 = vmatpush2.msra.mxu0 0.0
    %265 = vmatprep.subr.mxu0 0.0
    %266 = vmatpush2.msra.mxu0 0.0
    %267 = vmatprep.subr.mxu0 0.0
    %268 = vmatpush2.msra.mxu0 0.0
    %269 = vmatprep.subr.mxu0 0.0
    %270 = vmatpush2.msra.mxu0 0.0
    %271 = vmatprep.subr.mxu0 0.0
    %272 = vmatpush2.msra.mxu0 0.0
    %273 = vmatprep.subr.mxu0 0.0
    %274 = vmatpush2.msra.mxu0 0.0
    %275 = vmatprep.subr.mxu0 0.0
    %276 = vmatpush2.msra.mxu0 0.0
    %277 = vmatprep.subr.mxu0 0.0
    %278 = vmatpush2.msra.mxu0 0.0
    %279 = vmatprep.subr.mxu0 0.0
    %280 = vmatpush2.msra.mxu0 0.0
    %281 = vmatprep.subr.mxu0 0.0
    %282 = vmatpush2.msra.mxu0 0.0
    %283 = vmatprep.subr.mxu0 0.0
    %284 = vmatpush2.msra.mxu0 0.0
    %285 = vmatprep.subr.mxu0 0.0
    %286 = vmatpush2.msra.mxu0 0.0
    %287 = vmatprep.subr.mxu0 0.0
    %288 = vmatpush2.msra.mxu0 0.0
    %289 = vmatprep.subr.mxu0 0.0
    %290 = vmatpush2.msra.mxu0 0.0
    %291 = vmatprep.subr.mxu0 0.0
    %292 = vmatpush2.msra.mxu0 0.0
    %293 = vmatprep.subr.mxu0 0.0
    %294 = vmatpush2.msra.mxu0 0.0
    %295 = vmatprep.mubr.f32.mxu0 0.0
    %296 = vmatmul.mubr.f32.gmra.mxu0 %v210
    %v297 = vpop.f32.mrf.mxu0
    %v298 = vadd.f32 %v230, %v297
    %v299 = vpop.f32.mrf.mxu0
    %300 = vdwg.mxu0
    %v301 = vld [vmem:[#allocation5 + $0x180] sm:$0xff]
    %v302 = vld [vmem:[#allocation5 + $0x188] sm:$0xff]
    %v303 = vld [vmem:[#allocation5 + $0x190] sm:$0xff]
    %v304 = vld [vmem:[#allocation5 + $0x198] sm:$0xff]
    %v305 = vld [vmem:[#allocation5 + $0x1a0] sm:$0xff]
    %v306 = vld [vmem:[#allocation5 + $0x1a8] sm:$0xff]
    %v307 = vld [vmem:[#allocation5 + $0x1b0] sm:$0xff]
    %v308 = vld [vmem:[#allocation5 + $0x1b8] sm:$0xff]
    %v309 = vld [vmem:[#allocation5 + $0x1c0] sm:$0xff]
    %v310 = vld [vmem:[#allocation5 + $0x1c8] sm:$0xff]
    %v311 = vld [vmem:[#allocation5 + $0x1d0] sm:$0xff]
    %v312 = vld [vmem:[#allocation5 + $0x1d8] sm:$0xff]
    %v313 = vld [vmem:[#allocation5 + $0x1e0] sm:$0xff]
    %v314 = vld [vmem:[#allocation5 + $0x1e8] sm:$0xff]
    %v315 = vld [vmem:[#allocation5 + $0x1f0] sm:$0xff]
    %v316 = vld [vmem:[#allocation5 + $0x1f8] sm:$0xff]
    %v317 = vlaneseq
    %v318 = vshrl.u32 %v317, 7
    %v319 = vsub.s32 3, %v318
    %v320 = vrot.slane %v39, %v319
    %321 = vmatprep.subr.mxu0 0.0
    %322 = vmatpush1.msra.mxu0 %v316
    %323 = vmatprep.subr.mxu0 0.0
    %324 = vmatpush1.msra.mxu0 %v315
    %325 = vmatprep.subr.mxu0 0.0
    %326 = vmatpush1.msra.mxu0 %v314
    %327 = vmatprep.subr.mxu0 0.0
    %328 = vmatpush1.msra.mxu0 %v313
    %329 = vmatprep.subr.mxu0 0.0
    %330 = vmatpush1.msra.mxu0 %v312
    %331 = vmatprep.subr.mxu0 0.0
    %332 = vmatpush1.msra.mxu0 %v311
    %333 = vmatprep.subr.mxu0 0.0
    %334 = vmatpush1.msra.mxu0 %v310
    %335 = vmatprep.subr.mxu0 0.0
    %336 = vmatpush1.msra.mxu0 %v309
    %337 = vmatprep.subr.mxu0 0.0
    %338 = vmatpush1.msra.mxu0 %v308
    %339 = vmatprep.subr.mxu0 0.0
    %340 = vmatpush1.msra.mxu0 %v307
    %341 = vmatprep.subr.mxu0 0.0
    %342 = vmatpush1.msra.mxu0 %v306
    %343 = vmatprep.subr.mxu0 0.0
    %344 = vmatpush1.msra.mxu0 %v305
    %345 = vmatprep.subr.mxu0 0.0
    %346 = vmatpush1.msra.mxu0 %v304
    %347 = vmatprep.subr.mxu0 0.0
    %348 = vmatpush1.msra.mxu0 %v303
    %349 = vmatprep.subr.mxu0 0.0
    %350 = vmatpush1.msra.mxu0 %v302
    %351 = vmatprep.subr.mxu0 0.0
    %352 = vmatpush1.msra.mxu0 %v301
    %353 = vmatprep.subr.mxu0 0.0
    %354 = vmatpush2.msra.mxu0 0.0
    %355 = vmatprep.subr.mxu0 0.0
    %356 = vmatpush2.msra.mxu0 0.0
    %357 = vmatprep.subr.mxu0 0.0
    %358 = vmatpush2.msra.mxu0 0.0
    %359 = vmatprep.subr.mxu0 0.0
    %360 = vmatpush2.msra.mxu0 0.0
    %361 = vmatprep.subr.mxu0 0.0
    %362 = vmatpush2.msra.mxu0 0.0
    %363 = vmatprep.subr.mxu0 0.0
    %364 = vmatpush2.msra.mxu0 0.0
    %365 = vmatprep.subr.mxu0 0.0
    %366 = vmatpush2.msra.mxu0 0.0
    %367 = vmatprep.subr.mxu0 0.0
    %368 = vmatpush2.msra.mxu0 0.0
    %369 = vmatprep.subr.mxu0 0.0
    %370 = vmatpush2.msra.mxu0 0.0
    %371 = vmatprep.subr.mxu0 0.0
    %372 = vmatpush2.msra.mxu0 0.0
    %373 = vmatprep.subr.mxu0 0.0
    %374 = vmatpush2.msra.mxu0 0.0
    %375 = vmatprep.subr.mxu0 0.0
    %376 = vmatpush2.msra.mxu0 0.0
    %377 = vmatprep.subr.mxu0 0.0
    %378 = vmatpush2.msra.mxu0 0.0
    %379 = vmatprep.subr.mxu0 0.0
    %380 = vmatpush2.msra.mxu0 0.0
    %381 = vmatprep.subr.mxu0 0.0
    %382 = vmatpush2.msra.mxu0 0.0
    %383 = vmatprep.subr.mxu0 0.0
    %384 = vmatpush2.msra.mxu0 0.0
    %385 = vmatprep.mubr.f32.mxu0 0.0
    %386 = vmatmul.mubr.f32.gmra.mxu0 %v298
    %v387 = vpop.f32.mrf.mxu0
    %v388 = vadd.f32 %v320, %v387
    %v389 = vpop.f32.mrf.mxu0
    %390 = vdwg.mxu0
    %v391 = vmax.f32 %v388, 0.0
    %v392 = vld [vmem:[#allocation5 + $0x200] sm:$0xff]
    %v393 = vld [vmem:[#allocation5 + $0x208] sm:$0xff]
    %v394 = vld [vmem:[#allocation5 + $0x210] sm:$0xff]
    %v395 = vld [vmem:[#allocation5 + $0x218] sm:$0xff]
    %v396 = vld [vmem:[#allocation5 + $0x220] sm:$0xff]
    %v397 = vld [vmem:[#allocation5 + $0x228] sm:$0xff]
    %v398 = vld [vmem:[#allocation5 + $0x230] sm:$0xff]
    %v399 = vld [vmem:[#allocation5 + $0x238] sm:$0xff]
    %v400 = vld [vmem:[#allocation5 + $0x240] sm:$0xff]
    %v401 = vld [vmem:[#allocation5 + $0x248] sm:$0xff]
    %v402 = vld [vmem:[#allocation5 + $0x250] sm:$0xff]
    %v403 = vld [vmem:[#allocation5 + $0x258] sm:$0xff]
    %v404 = vld [vmem:[#allocation5 + $0x260] sm:$0xff]
    %v405 = vld [vmem:[#allocation5 + $0x268] sm:$0xff]
    %v406 = vld [vmem:[#allocation5 + $0x270] sm:$0xff]
    %v407 = vld [vmem:[#allocation5 + $0x278] sm:$0xff]
    %v408 = vlaneseq
    %v409 = vshrl.u32 %v408, 7
    %v410 = vsub.s32 4, %v409
    %v411 = vrot.slane %v39, %v410
    %412 = vmatprep.subr.mxu0 0.0
    %413 = vmatpush1.msra.mxu0 %v407
    %414 = vmatprep.subr.mxu0 0.0
    %415 = vmatpush1.msra.mxu0 %v406
    %416 = vmatprep.subr.mxu0 0.0
    %417 = vmatpush1.msra.mxu0 %v405
    %418 = vmatprep.subr.mxu0 0.0
    %419 = vmatpush1.msra.mxu0 %v404
    %420 = vmatprep.subr.mxu0 0.0
    %421 = vmatpush1.msra.mxu0 %v403
    %422 = vmatprep.subr.mxu0 0.0
    %423 = vmatpush1.msra.mxu0 %v402
    %424 = vmatprep.subr.mxu0 0.0
    %425 = vmatpush1.msra.mxu0 %v401
    %426 = vmatprep.subr.mxu0 0.0
    %427 = vmatpush1.msra.mxu0 %v400
    %428 = vmatprep.subr.mxu0 0.0
    %429 = vmatpush1.msra.mxu0 %v399
    %430 = vmatprep.subr.mxu0 0.0
    %431 = vmatpush1.msra.mxu0 %v398
    %432 = vmatprep.subr.mxu0 0.0
    %433 = vmatpush1.msra.mxu0 %v397
    %434 = vmatprep.subr.mxu0 0.0
    %435 = vmatpush1.msra.mxu0 %v396
    %436 = vmatprep.subr.mxu0 0.0
    %437 = vmatpush1.msra.mxu0 %v395
    %438 = vmatprep.subr.mxu0 0.0
    %439 = vmatpush1.msra.mxu0 %v394
    %440 = vmatprep.subr.mxu0 0.0
    %441 = vmatpush1.msra.mxu0 %v393
    %442 = vmatprep.subr.mxu0 0.0
    %443 = vmatpush1.msra.mxu0 %v392
    %444 = vmatprep.subr.mxu0 0.0
    %445 = vmatpush2.msra.mxu0 0.0
    %446 = vmatprep.subr.mxu0 0.0
    %447 = vmatpush2.msra.mxu0 0.0
    %448 = vmatprep.subr.mxu0 0.0
    %449 = vmatpush2.msra.mxu0 0.0
    %450 = vmatprep.subr.mxu0 0.0
    %451 = vmatpush2.msra.mxu0 0.0
    %452 = vmatprep.subr.mxu0 0.0
    %453 = vmatpush2.msra.mxu0 0.0
    %454 = vmatprep.subr.mxu0 0.0
    %455 = vmatpush2.msra.mxu0 0.0
    %456 = vmatprep.subr.mxu0 0.0
    %457 = vmatpush2.msra.mxu0 0.0
    %458 = vmatprep.subr.mxu0 0.0
    %459 = vmatpush2.msra.mxu0 0.0
    %460 = vmatprep.subr.mxu0 0.0
    %461 = vmatpush2.msra.mxu0 0.0
    %462 = vmatprep.subr.mxu0 0.0
    %463 = vmatpush2.msra.mxu0 0.0
    %464 = vmatprep.subr.mxu0 0.0
    %465 = vmatpush2.msra.mxu0 0.0
    %466 = vmatprep.subr.mxu0 0.0
    %467 = vmatpush2.msra.mxu0 0.0
    %468 = vmatprep.subr.mxu0 0.0
    %469 = vmatpush2.msra.mxu0 0.0
    %470 = vmatprep.subr.mxu0 0.0
    %471 = vmatpush2.msra.mxu0 0.0
    %472 = vmatprep.subr.mxu0 0.0
    %473 = vmatpush2.msra.mxu0 0.0
    %474 = vmatprep.subr.mxu0 0.0
    %475 = vmatpush2.msra.mxu0 0.0
    %476 = vmatprep.mubr.f32.mxu0 0.0
    %477 = vmatmul.mubr.f32.gmra.mxu0 %v391
    %v478 = vpop.f32.mrf.mxu0
    %v479 = vadd.f32 %v411, %v478
    %v480 = vpop.f32.mrf.mxu0
    %481 = vdwg.mxu0
    %v482 = vlaneseq
    %v483 = vand.u32 %v482, 127
    %vm484 = vcmp.lt.s32.totalorder %v483, 7
    %v485 = vsel %vm484, %v479, -1e+30
    %486 = vmax.xlane.f32.xlu0 %v485
    %v487 = vpop.xlane.xlu0 %486
    %v488 = vsub.f32 %v485, %v487
    %v489 = vmul.f32 %v488, 1.442695
    %v490 = vpow.pop %v489
    %491 = vadd.xlane.f32.xlu0 %v490
    %v492 = vpop.xlane.xlu0 %491
    %v493 = vrcp.pop %v492
    %v494 = vmul.f32 %v490, %v493
    %495 = vst [vmem:[#allocation7] sm:$0xff] %v494
    // Predicated region
    $region18: #{tpu_custom_call.1} parent=1 // pred_check
      _
    $region19: #{tpu_custom_call.1} parent=1 // pred_check_branch
      %497 = sbr.rel (0) target = $region21
    $region20: #{tpu_custom_call.1} parent=1 // pred_region
      %s499 = ssub.s32 128, 128
      %500 = vsyncadd [#allocation4], %s499
      %s502 = sshll.u32 [#allocation7], 4
      %s503 = int_to_ptr.vmem [resolvable:$true] %s502
      %505 = dma.vmem_to_hbm [thread:$0]  %s503, 128, %s2, [#allocation4]
    $region21: #{tpu_custom_call.1} parent=1 // pred_fallthru
      _
    // Predicated region
    $region22: #{tpu_custom_call.1} parent=1 // pred_check
      _
    $region23: #{tpu_custom_call.1} parent=1 // pred_check_branch
      %507 = sbr.rel (0) target = $region25
    $region24: #{tpu_custom_call.1} parent=1 // pred_region
      %508 = dma.done [#allocation4], 128
    $region25: #{tpu_custom_call.1} parent=1 // pred_fallthru
      _
    %509 = vsyncpa [#allocation3], 1
    %510 = vsyncpa [#allocation6], 1
    %511 = vsyncpa [#allocation4], 1

</llo_original>
